<compile_context>
chip_gen: v5e
topology: v5e:2x2
jax: 0.10.0
libtpu: 0.0.40
codegen_flags: <defaults>
</compile_context>

<pallas_src>
import jax
import jax.numpy as jnp
from jax.experimental import pallas as pl
from jax.experimental.pallas import tpu as pltpu

CHANNELS = [64, 32, 16, 8, 4]          # hidden widths from the module __init__
LAYER_DIMS = [3] + CHANNELS + [1]      # 3 -> 64 -> 32 -> 16 -> 8 -> 4 -> 1
BN_EPS = 1e-5

MAX_DOUT = 64                          # largest output width (sublane extent of the pack)
PACK_LANES = 128                       # lane extent of the packed weight array
BIAS_LANE = 64                         # bias column inside the packed array (> max d_in-1)


def _round_up(v, m):
  return ((v + m - 1) // m) * m


def _apm_mlp_kernel(x_ref, wb_ref, o_ref):
  """Fused 6-layer MLP on a (3, tile_m) activation slab.

  x_ref : (3, tile_m)        points on lanes, xyz on sublanes
  wb_ref: (6, 64, 128)       packed [W_i | b_i] per layer (resident constant)
  o_ref : (1, tile_m)        lane-dense output row
  """
  h = x_ref[...].astype(jnp.float32)                       # (3, tile_m)
  for li in range(len(LAYER_DIMS) - 1):
    d_in, d_out = LAYER_DIMS[li], LAYER_DIMS[li + 1]
    w = wb_ref[li, :d_out, :d_in]                          # (d_out, d_in) static slice
    b = wb_ref[li, :d_out, BIAS_LANE:BIAS_LANE + 1]        # (d_out, 1)
    z = jnp.dot(w, h, preferred_element_type=jnp.float32) + b   # (d_out, tile_m)
    # sigmoid(z) = 0.5 * tanh(z/2) + 0.5 : one EUP transcendental per element
    # (the kernel is EUP-bound; mul/add land on the otherwise-idle VPU slots).
    h = 0.5 * jnp.tanh(0.5 * z) + 0.5
  o_ref[...] = h.astype(o_ref.dtype)                       # (1, tile_m) lane-dense store


def pack_params(params):
  """Pack the 6 folded (W_eff, b_eff) pairs into one (6, 64, 128) array.

  Row block [i, :d_out, :d_in] holds W_i^T (shape (d_out, d_in)); column
  BIAS_LANE holds b_i.  Unused entries are zero (never read by the kernel).
  """
  pack = jnp.zeros((len(params), MAX_DOUT, PACK_LANES), jnp.float32)
  for li, (w_eff, b_eff) in enumerate(params):
    d_in, d_out = w_eff.shape
    pack = pack.at[li, :d_out, :d_in].set(w_eff.T)
    pack = pack.at[li, :d_out, BIAS_LANE].set(b_eff.reshape(-1))
  return pack


def apm_p_forward(p, params, *, tile_m=512):
  """p: (B, N, 3) float32.  params: list of 6 (W_eff, b_eff) pairs.

  Returns (B*N, 1) float32 — identical to APM_p.forward in eval mode.
  """
  B, N, C = p.shape
  assert C == 3
  M = B * N

  # Points on lanes, xyz on sublanes: (3, M).
  x = p.reshape(M, C).astype(jnp.float32).T

  # Tile along the lane (point) axis; pad M so no divisibility constraint.
  tile_m = _round_up(max(tile_m, 128), 128)
  tile = min(tile_m, _round_up(M, 128))
  m_pad = _round_up(M, tile)
  if m_pad != M:
    x = jnp.pad(x, ((0, 0), (0, m_pad - M)))

  wb = pack_params(params)

  out = pl.pallas_call(
      _apm_mlp_kernel,
      out_shape=jax.ShapeDtypeStruct((1, m_pad), jnp.float32),
      grid_spec=pltpu.PrefetchScalarGridSpec(
          num_scalar_prefetch=0,
          grid=(m_pad // tile,),
          in_specs=[
              pl.BlockSpec((C, tile), lambda i: (0, i)),          # activation slab
              pl.BlockSpec(wb.shape, lambda i: (0, 0, 0)),        # resident weights
          ],
          out_specs=pl.BlockSpec((1, tile), lambda i: (0, i)),    # lane-dense output
      ),
      compiler_params=pltpu.CompilerParams(
          dimension_semantics=("parallel",)),
  )(x, wb)
  return out[0, :M].reshape(M, 1)


def make_params(key):
  """Deterministic synthetic parameters.

  For each stage i: Linear(W_i, b_i) followed by eval-mode BatchNorm1d
  (gamma, beta, running_mean, running_var).  Folded exactly into (W_eff, b_eff):
     k     = gamma / sqrt(running_var + eps)
     W_eff = W * k
     b_eff = (b - running_mean) * k + beta
  Dropout (eval) is identity, so it contributes nothing.
  """
  params = []
  for li in range(len(LAYER_DIMS) - 1):
    d_in, d_out = LAYER_DIMS[li], LAYER_DIMS[li + 1]
    key, kw, kb, kg, kbe, km, kv = jax.random.split(key, 7)
    w = jax.random.normal(kw, (d_in, d_out), jnp.float32) * 0.2
    b = jax.random.normal(kb, (d_out,), jnp.float32) * 0.1
    gamma = 1.0 + 0.1 * jax.random.normal(kg, (d_out,), jnp.float32)
    beta = 0.1 * jax.random.normal(kbe, (d_out,), jnp.float32)
    run_mean = 0.1 * jax.random.normal(km, (d_out,), jnp.float32)
    run_var = 0.5 + jnp.abs(jax.random.normal(kv, (d_out,), jnp.float32))
    k = gamma * jax.lax.rsqrt(run_var + BN_EPS)
    w_eff = w * k[None, :]
    b_eff = ((b - run_mean) * k + beta)[None, :]      # (1, d_out)
    params.append((w_eff, b_eff))
  return params


def reference_forward(p, params):
  x = p.reshape(-1, p.shape[-1]).astype(jnp.float32)
  for (w, b) in params:
    x = jax.nn.sigmoid(x @ w + b)
  return x


if __name__ == "__main__":
  key = jax.random.PRNGKey(0)
  kp, kparams = jax.random.split(key)
  params = make_params(kparams)

  # Main check: M = 1024 rows -> 2 grid steps at tile_m=512 (keeps both v7x TCs busy).
  B, N = 2, 512
  p = jax.random.normal(kp, (B, N, 3), jnp.float32)
  out = jax.block_until_ready(apm_p_forward(p, params, tile_m=512))
  ref = reference_forward(p, params)
  assert out.shape == (B * N, 1)
  assert jnp.allclose(out, ref, atol=5e-3, rtol=5e-3), float(jnp.max(jnp.abs(out - ref)))

  # Ragged check: M not a multiple of 128 exercises the pad/slice path.
  p2 = jax.random.normal(jax.random.PRNGKey(1), (1, 200, 3), jnp.float32)
  out2 = jax.block_until_ready(apm_p_forward(p2, params, tile_m=512))
  ref2 = reference_forward(p2, params)
  assert out2.shape == (200, 1)
  assert jnp.allclose(out2, ref2, atol=5e-3, rtol=5e-3), float(jnp.max(jnp.abs(out2 - ref2)))

  print("KERNEL_OK")
</pallas_src>

<mosaic_0001>
module attributes {stable_mosaic.version = 11 : i64} {
  func.func @_apm_mlp_kernel(%arg0: i32, %arg1: memref<3x512xf32, #tpu.memory_space<vmem>>, %arg2: memref<6x64x128xf32, #tpu.memory_space<vmem>>, %arg3: memref<1x512xf32, #tpu.memory_space<vmem>>) attributes {dimension_semantics = [#tpu.dimension_semantics<parallel>], iteration_bounds = array<i64: 2>, scalar_prefetch = 0 : i64, scratch_operands = 0 : i64, tpu.core_type = #tpu.core_type<tc>, window_params = [{transform_indices = @transform_0, window_bounds = array<i64: 3, 512>}, {pipeline_mode = #tpu.pipeline_mode<synchronous>, transform_indices = @transform_1, window_bounds = array<i64: 6, 64, 128>}, {transform_indices = @transform_2, window_bounds = array<i64: 1, 512>}]} {
    %c0 = arith.constant 0 : index
    %c0_0 = arith.constant 0 : index
    %0 = vector.load %arg1[%c0, %c0_0] : memref<3x512xf32, #tpu.memory_space<vmem>>, vector<3x512xf32>
    %c0_1 = arith.constant 0 : index
    %c0_2 = arith.constant 0 : index
    %c0_3 = arith.constant 0 : index
    %1 = vector.load %arg2[%c0_1, %c0_2, %c0_3] : memref<6x64x128xf32, #tpu.memory_space<vmem>>, vector<1x64x3xf32>
    %2 = vector.shape_cast %1 : vector<1x64x3xf32> to vector<64x3xf32>
    %c0_4 = arith.constant 0 : index
    %c0_5 = arith.constant 0 : index
    %c64 = arith.constant 64 : index
    %3 = vector.load %arg2[%c0_4, %c0_5, %c64] : memref<6x64x128xf32, #tpu.memory_space<vmem>>, vector<1x64x1xf32>
    %4 = vector.shape_cast %3 : vector<1x64x1xf32> to vector<64x1xf32>
    %cst = arith.constant dense<0.000000e+00> : vector<64x512xf32>
    %5 = tpu.matmul %2, %0, %cst {dimension_numbers = #tpu.dot_dimension_numbers<[1], [0], [0], [1], [0, 0, 1, 1], [], []>} : vector<64x3xf32>, vector<3x512xf32>, vector<64x512xf32> -> vector<64x512xf32>
    %6 = vector.broadcast %4 : vector<64x1xf32> to vector<64x512xf32>
    %7 = arith.addf %5, %6 : vector<64x512xf32>
    %cst_6 = arith.constant 5.000000e-01 : f32
    %8 = vector.broadcast %cst_6 : f32 to vector<64x512xf32>
    %9 = arith.mulf %8, %7 : vector<64x512xf32>
    %10 = math.tanh %9 : vector<64x512xf32>
    %cst_7 = arith.constant 5.000000e-01 : f32
    %11 = vector.broadcast %cst_7 : f32 to vector<64x512xf32>
    %12 = arith.mulf %11, %10 : vector<64x512xf32>
    %cst_8 = arith.constant 5.000000e-01 : f32
    %13 = vector.broadcast %cst_8 : f32 to vector<64x512xf32>
    %14 = arith.addf %12, %13 : vector<64x512xf32>
    %c1 = arith.constant 1 : index
    %c0_9 = arith.constant 0 : index
    %c0_10 = arith.constant 0 : index
    %15 = vector.load %arg2[%c1, %c0_9, %c0_10] : memref<6x64x128xf32, #tpu.memory_space<vmem>>, vector<1x32x64xf32>
    %16 = vector.shape_cast %15 : vector<1x32x64xf32> to vector<32x64xf32>
    %c1_11 = arith.constant 1 : index
    %c0_12 = arith.constant 0 : index
    %c64_13 = arith.constant 64 : index
    %17 = vector.load %arg2[%c1_11, %c0_12, %c64_13] : memref<6x64x128xf32, #tpu.memory_space<vmem>>, vector<1x32x1xf32>
    %18 = vector.shape_cast %17 : vector<1x32x1xf32> to vector<32x1xf32>
    %cst_14 = arith.constant dense<0.000000e+00> : vector<32x512xf32>
    %19 = tpu.matmul %16, %14, %cst_14 {dimension_numbers = #tpu.dot_dimension_numbers<[1], [0], [0], [1], [0, 0, 1, 1], [], []>} : vector<32x64xf32>, vector<64x512xf32>, vector<32x512xf32> -> vector<32x512xf32>
    %20 = vector.broadcast %18 : vector<32x1xf32> to vector<32x512xf32>
    %21 = arith.addf %19, %20 : vector<32x512xf32>
    %cst_15 = arith.constant 5.000000e-01 : f32
    %22 = vector.broadcast %cst_15 : f32 to vector<32x512xf32>
    %23 = arith.mulf %22, %21 : vector<32x512xf32>
    %24 = math.tanh %23 : vector<32x512xf32>
    %cst_16 = arith.constant 5.000000e-01 : f32
    %25 = vector.broadcast %cst_16 : f32 to vector<32x512xf32>
    %26 = arith.mulf %25, %24 : vector<32x512xf32>
    %cst_17 = arith.constant 5.000000e-01 : f32
    %27 = vector.broadcast %cst_17 : f32 to vector<32x512xf32>
    %28 = arith.addf %26, %27 : vector<32x512xf32>
    %c2 = arith.constant 2 : index
    %c0_18 = arith.constant 0 : index
    %c0_19 = arith.constant 0 : index
    %29 = vector.load %arg2[%c2, %c0_18, %c0_19] : memref<6x64x128xf32, #tpu.memory_space<vmem>>, vector<1x16x32xf32>
    %30 = vector.shape_cast %29 : vector<1x16x32xf32> to vector<16x32xf32>
    %c2_20 = arith.constant 2 : index
    %c0_21 = arith.constant 0 : index
    %c64_22 = arith.constant 64 : index
    %31 = vector.load %arg2[%c2_20, %c0_21, %c64_22] : memref<6x64x128xf32, #tpu.memory_space<vmem>>, vector<1x16x1xf32>
    %32 = vector.shape_cast %31 : vector<1x16x1xf32> to vector<16x1xf32>
    %cst_23 = arith.constant dense<0.000000e+00> : vector<16x512xf32>
    %33 = tpu.matmul %30, %28, %cst_23 {dimension_numbers = #tpu.dot_dimension_numbers<[1], [0], [0], [1], [0, 0, 1, 1], [], []>} : vector<16x32xf32>, vector<32x512xf32>, vector<16x512xf32> -> vector<16x512xf32>
    %34 = vector.broadcast %32 : vector<16x1xf32> to vector<16x512xf32>
    %35 = arith.addf %33, %34 : vector<16x512xf32>
    %cst_24 = arith.constant 5.000000e-01 : f32
    %36 = vector.broadcast %cst_24 : f32 to vector<16x512xf32>
    %37 = arith.mulf %36, %35 : vector<16x512xf32>
    %38 = math.tanh %37 : vector<16x512xf32>
    %cst_25 = arith.constant 5.000000e-01 : f32
    %39 = vector.broadcast %cst_25 : f32 to vector<16x512xf32>
    %40 = arith.mulf %39, %38 : vector<16x512xf32>
    %cst_26 = arith.constant 5.000000e-01 : f32
    %41 = vector.broadcast %cst_26 : f32 to vector<16x512xf32>
    %42 = arith.addf %40, %41 : vector<16x512xf32>
    %c3 = arith.constant 3 : index
    %c0_27 = arith.constant 0 : index
    %c0_28 = arith.constant 0 : index
    %43 = vector.load %arg2[%c3, %c0_27, %c0_28] : memref<6x64x128xf32, #tpu.memory_space<vmem>>, vector<1x8x16xf32>
    %44 = vector.shape_cast %43 : vector<1x8x16xf32> to vector<8x16xf32>
    %c3_29 = arith.constant 3 : index
    %c0_30 = arith.constant 0 : index
    %c64_31 = arith.constant 64 : index
    %45 = vector.load %arg2[%c3_29, %c0_30, %c64_31] : memref<6x64x128xf32, #tpu.memory_space<vmem>>, vector<1x8x1xf32>
    %46 = vector.shape_cast %45 : vector<1x8x1xf32> to vector<8x1xf32>
    %cst_32 = arith.constant dense<0.000000e+00> : vector<8x512xf32>
    %47 = tpu.matmul %44, %42, %cst_32 {dimension_numbers = #tpu.dot_dimension_numbers<[1], [0], [0], [1], [0, 0, 1, 1], [], []>} : vector<8x16xf32>, vector<16x512xf32>, vector<8x512xf32> -> vector<8x512xf32>
    %48 = vector.broadcast %46 : vector<8x1xf32> to vector<8x512xf32>
    %49 = arith.addf %47, %48 : vector<8x512xf32>
    %cst_33 = arith.constant 5.000000e-01 : f32
    %50 = vector.broadcast %cst_33 : f32 to vector<8x512xf32>
    %51 = arith.mulf %50, %49 : vector<8x512xf32>
    %52 = math.tanh %51 : vector<8x512xf32>
    %cst_34 = arith.constant 5.000000e-01 : f32
    %53 = vector.broadcast %cst_34 : f32 to vector<8x512xf32>
    %54 = arith.mulf %53, %52 : vector<8x512xf32>
    %cst_35 = arith.constant 5.000000e-01 : f32
    %55 = vector.broadcast %cst_35 : f32 to vector<8x512xf32>
    %56 = arith.addf %54, %55 : vector<8x512xf32>
    %c4 = arith.constant 4 : index
    %c0_36 = arith.constant 0 : index
    %c0_37 = arith.constant 0 : index
    %57 = vector.load %arg2[%c4, %c0_36, %c0_37] : memref<6x64x128xf32, #tpu.memory_space<vmem>>, vector<1x4x8xf32>
    %58 = vector.shape_cast %57 : vector<1x4x8xf32> to vector<4x8xf32>
    %c4_38 = arith.constant 4 : index
    %c0_39 = arith.constant 0 : index
    %c64_40 = arith.constant 64 : index
    %59 = vector.load %arg2[%c4_38, %c0_39, %c64_40] : memref<6x64x128xf32, #tpu.memory_space<vmem>>, vector<1x4x1xf32>
    %60 = vector.shape_cast %59 : vector<1x4x1xf32> to vector<4x1xf32>
    %cst_41 = arith.constant dense<0.000000e+00> : vector<4x512xf32>
    %61 = tpu.matmul %58, %56, %cst_41 {dimension_numbers = #tpu.dot_dimension_numbers<[1], [0], [0], [1], [0, 0, 1, 1], [], []>} : vector<4x8xf32>, vector<8x512xf32>, vector<4x512xf32> -> vector<4x512xf32>
    %62 = vector.broadcast %60 : vector<4x1xf32> to vector<4x512xf32>
    %63 = arith.addf %61, %62 : vector<4x512xf32>
    %cst_42 = arith.constant 5.000000e-01 : f32
    %64 = vector.broadcast %cst_42 : f32 to vector<4x512xf32>
    %65 = arith.mulf %64, %63 : vector<4x512xf32>
    %66 = math.tanh %65 : vector<4x512xf32>
    %cst_43 = arith.constant 5.000000e-01 : f32
    %67 = vector.broadcast %cst_43 : f32 to vector<4x512xf32>
    %68 = arith.mulf %67, %66 : vector<4x512xf32>
    %cst_44 = arith.constant 5.000000e-01 : f32
    %69 = vector.broadcast %cst_44 : f32 to vector<4x512xf32>
    %70 = arith.addf %68, %69 : vector<4x512xf32>
    %c5 = arith.constant 5 : index
    %c0_45 = arith.constant 0 : index
    %c0_46 = arith.constant 0 : index
    %71 = vector.load %arg2[%c5, %c0_45, %c0_46] : memref<6x64x128xf32, #tpu.memory_space<vmem>>, vector<1x1x4xf32>
    %72 = vector.shape_cast %71 : vector<1x1x4xf32> to vector<1x4xf32>
    %c5_47 = arith.constant 5 : index
    %c0_48 = arith.constant 0 : index
    %c64_49 = arith.constant 64 : index
    %73 = vector.load %arg2[%c5_47, %c0_48, %c64_49] : memref<6x64x128xf32, #tpu.memory_space<vmem>>, vector<1x1x1xf32>
    %74 = vector.shape_cast %73 : vector<1x1x1xf32> to vector<1x1xf32>
    %cst_50 = arith.constant dense<0.000000e+00> : vector<1x512xf32>
    %75 = tpu.matmul %72, %70, %cst_50 {dimension_numbers = #tpu.dot_dimension_numbers<[1], [0], [0], [1], [0, 0, 1, 1], [], []>} : vector<1x4xf32>, vector<4x512xf32>, vector<1x512xf32> -> vector<1x512xf32>
    %76 = vector.broadcast %74 : vector<1x1xf32> to vector<1x512xf32>
    %77 = arith.addf %75, %76 : vector<1x512xf32>
    %cst_51 = arith.constant 5.000000e-01 : f32
    %78 = vector.broadcast %cst_51 : f32 to vector<1x512xf32>
    %79 = arith.mulf %78, %77 : vector<1x512xf32>
    %80 = math.tanh %79 : vector<1x512xf32>
    %cst_52 = arith.constant 5.000000e-01 : f32
    %81 = vector.broadcast %cst_52 : f32 to vector<1x512xf32>
    %82 = arith.mulf %81, %80 : vector<1x512xf32>
    %cst_53 = arith.constant 5.000000e-01 : f32
    %83 = vector.broadcast %cst_53 : f32 to vector<1x512xf32>
    %84 = arith.addf %82, %83 : vector<1x512xf32>
    %c0_54 = arith.constant 0 : index
    %c0_55 = arith.constant 0 : index
    %85 = vector.load %arg3[%c0_54, %c0_55] : memref<1x512xf32, #tpu.memory_space<vmem>>, vector<1x512xf32>
    tpu.vector_store %arg3[%c0_54, %c0_55], %84 {strides = array<i32>} : memref<1x512xf32, #tpu.memory_space<vmem>>, vector<1x512xf32>,
    return
  }
  func.func @transform_0(%arg0: i32) -> (i32, i32) {
    %c0_i32 = arith.constant 0 : i32
    %c0_i32_0 = arith.constant 0 : i32
    return %c0_i32, %arg0 : i32, i32
  }
  func.func @transform_1(%arg0: i32) -> (i32, i32, i32) {
    %c0_i32 = arith.constant 0 : i32
    %c0_i32_0 = arith.constant 0 : i32
    %c0_i32_1 = arith.constant 0 : i32
    %c0_i32_2 = arith.constant 0 : i32
    return %c0_i32, %c0_i32_0, %c0_i32_1 : i32, i32, i32
  }
  func.func @transform_2(%arg0: i32) -> (i32, i32) {
    %c0_i32 = arith.constant 0 : i32
    %c0_i32_0 = arith.constant 0 : i32
    return %c0_i32, %arg0 : i32, i32
  }
}

</mosaic_0001>

<llo_original>
// kernel: tpu_custom_call.1
$region0: #{tpu_custom_call.1}
  #allocation0 [shape = 'u32[]', space=smem, size = 0x4, offset = 0x4, fixed_abs, tag = 'smem constant byte address 0x4 - core index']
  #allocation1 [shape = 'u32[72,128]{1,0:T(1,128)}', space=vmem, size = 0x9000, scoped, tag = 'internal scratch']
  %s0 = inlined_call_operand.hbm [shape: f32[3,1024], index: 0, kind: input, shape index: {}]
  %s1 = inlined_call_operand.hbm [shape: f32[6,64,128], index: 1, kind: input, shape index: {}]
  %s2 = inlined_call_operand.hbm [shape: f32[1,1024], index: 2, kind: output, shape index: {}]
  %s3 = sld [smem:[#allocation0]]
  $region49: #{tpu_custom_call.1} parent=0
    _
  %s5 = ssub.s32 1, %s3
  %s6 = scalar_select 0, %s5, %s3
  $region1: #{tpu_custom_call.1} parent=0
    #allocation2 [shape = 'u8[16384]{0}', space=vmem, size = 0x4000, scoped, tag = 'input window, operand 0']
    #allocation3 [shape = 's32[2]{0}', space=sflag, size = 0x8, scoped, tag = 'scoped memory for tpu_custom_call.1']
    #allocation4 [shape = 's32[2]{0}', space=sflag, size = 0x8, scoped, tag = 'scoped memory for tpu_custom_call.1']
    #allocation5 [shape = 'u8[196608]{0}', space=vmem, size = 0x30000, scoped, tag = 'input window, operand 1, single buffered']
    #allocation6 [shape = 's32[1]{0}', space=sflag, size = 0x4, scoped, tag = 'scoped memory for tpu_custom_call.1']
    #allocation7 [shape = 'u8[4096]{0}', space=vmem, size = 0x1000, scoped, tag = 'output window, operand 0']
    %7 = vsyncpa [#allocation3], 0
    %s8 = scalar_lea.sflag [#allocation3], 1
    %9 = vsyncpa %s8, 0
    %10 = vsyncpa [#allocation6], 0
    %11 = vsyncpa [#allocation4], 0
    %s12 = scalar_lea.sflag [#allocation4], 1
    %13 = vsyncpa %s12, 0
    loop: start=0, step=1, limit=4
    $region2: #{tpu_custom_call.1} parent=1 // loop_pre_header
      _
    $region3: #{tpu_custom_call.1} parent=1 // loop_header
      %s15 = sphi 0, %s19
      %p16 = scmp.ge.s32.totalorder %s15, 4
      %s25 = sphi 0, %s27
      %s28 = sphi 0, %s25
      %s29 = sphi 0, %s28
      %s45 = sphi 0, %s29
      %s49 = sphi 0, %s49
      %s51 = sphi 0, %s49
      %s52 = sphi 0, %s51
      %s66 = sphi 0, %s52
      %s72 = sphi 0, %s74
      %s75 = sphi 0, %s72
      %s76 = sphi 0, %s75
      %s92 = sphi 0, %s76
    $region4: #{tpu_custom_call.1} parent=1 // loop_header_branch
      %18 = sbr.rel (%p16) target = $region8
    $region5: #{tpu_custom_call.1} parent=1 // loop_body
      %s20 = ssub.s32 %s15, 1
      %s21 = ssub.s32 %s15, 2
      %s22 = sadd.s32 %s15, 1
      %s23 = ssub.s32 %s15, %s22
      %p24 = scmp.eq.s32.totalorder %s23, 0
      %s26 = sadd.s32 %s25, 1
      %s27 = scalar_select %p24, %s25, %s26
      %p30 = pneg %p24
      %p31 = scmp.eq.s32.totalorder %s15, 1
      %p32 = por %p30, %p31
      %p33 = scmp.ne.s32.totalorder %s25, %s28
      %p34 = scmp.eq.s32.totalorder %s15, 0
      %p35 = por %p33, %p34
      %p36 = scmp.ne.s32.totalorder %s25, %s28
      %p37 = scmp.eq.s32.totalorder %s20, 1
      %p38 = por %p36, %p37
      %p39 = scmp.ne.s32.totalorder %s28, %s29
      %p40 = scmp.eq.s32.totalorder %s20, 0
      %p41 = por %p39, %p40
      %p42 = scmp.ne.s32.totalorder %s28, %s29
      %p43 = scmp.eq.s32.totalorder %s21, 1
      %p44 = por %p42, %p43
      %p46 = scmp.ne.s32.totalorder %s29, %s45
      %p47 = scmp.eq.s32.totalorder %s21, 0
      %p48 = por %p46, %p47
      %s50 = sadd.s32 %s49, 1
      %p53 = scmp.eq.s32.totalorder %s15, 1
      %p54 = scmp.ne.s32.totalorder %s49, %s51
      %p55 = scmp.eq.s32.totalorder %s15, 0
      %p56 = por %p54, %p55
      %p57 = scmp.ne.s32.totalorder %s49, %s51
      %p58 = scmp.eq.s32.totalorder %s20, 1
      %p59 = por %p57, %p58
      %p60 = scmp.ne.s32.totalorder %s51, %s52
      %p61 = scmp.eq.s32.totalorder %s20, 0
      %p62 = por %p60, %p61
      %p63 = scmp.ne.s32.totalorder %s51, %s52
      %p64 = scmp.eq.s32.totalorder %s21, 1
      %p65 = por %p63, %p64
      %p67 = scmp.ne.s32.totalorder %s52, %s66
      %p68 = scmp.eq.s32.totalorder %s21, 0
      %p69 = por %p67, %p68
      %s70 = ssub.s32 %s15, %s22
      %p71 = scmp.eq.s32.totalorder %s70, 0
      %s73 = sadd.s32 %s72, 1
      %s74 = scalar_select %p71, %s72, %s73
      %p77 = pneg %p71
      %p78 = scmp.eq.s32.totalorder %s15, 1
      %p79 = por %p77, %p78
      %p80 = scmp.ne.s32.totalorder %s72, %s75
      %p81 = scmp.eq.s32.totalorder %s15, 0
      %p82 = por %p80, %p81
      %p83 = scmp.ne.s32.totalorder %s72, %s75
      %p84 = scmp.eq.s32.totalorder %s20, 1
      %p85 = por %p83, %p84
      %p86 = scmp.ne.s32.totalorder %s75, %s76
      %p87 = scmp.eq.s32.totalorder %s20, 0
      %p88 = por %p86, %p87
      %p89 = scmp.ne.s32.totalorder %s75, %s76
      %p90 = scmp.eq.s32.totalorder %s21, 1
      %p91 = por %p89, %p90
      %p93 = scmp.ne.s32.totalorder %s76, %s92
      %p94 = scmp.eq.s32.totalorder %s21, 0
      %p95 = por %p93, %p94
      %p96 = scmp.le.s32.totalorder 1, %s15
      %p97 = scmp.lt.s32.totalorder %s15, 3
      %p98 = pnand %p96, %p97
      %p99 = pneg %p98
      // Predicated region
      $region9: #{tpu_custom_call.1} parent=5 // pred_check
        _
      $region10: #{tpu_custom_call.1} parent=5 // pred_check_branch
        %101 = sbr.rel (%p98) target = $region12
      $region11: #{tpu_custom_call.1} parent=5 // pred_region
        %s102 = ssub.s32 %s15, 1
        // Predicated region
        $region13: #{tpu_custom_call.1} parent=11 // pred_check
          %p103 = pneg %p62
        $region14: #{tpu_custom_call.1} parent=11 // pred_check_branch
          %105 = sbr.rel (%p103) target = $region16
        $region15: #{tpu_custom_call.1} parent=11 // pred_region
          %107 = vsyncadd [#allocation6], 0
          %s108 = sshll.u32 %s1, 4
          %s109 = int_to_ptr.hbm [resolvable:$true] %s108
          %s110 = sshll.u32 [#allocation5], 4
          %s111 = int_to_ptr.vmem [resolvable:$true] %s110
          %116 = dma.hbm_to_vmem [thread:$0]  %s109, 6144, %s111, [#allocation6], 128, 128, 8
        $region16: #{tpu_custom_call.1} parent=11 // pred_fallthru
          _
      $region12: #{tpu_custom_call.1} parent=5 // pred_fallthru
        _
      %p117 = scmp.lt.s32.totalorder %s15, 2
      // Predicated region
      $region17: #{tpu_custom_call.1} parent=5 // pred_check
        %p118 = pneg %p117
      $region18: #{tpu_custom_call.1} parent=5 // pred_check_branch
        %120 = sbr.rel (%p118) target = $region20
      $region19: #{tpu_custom_call.1} parent=5 // pred_region
        // Predicated region
        $region21: #{tpu_custom_call.1} parent=19 // pred_check
          %p121 = pneg %p35
        $region22: #{tpu_custom_call.1} parent=19 // pred_check_branch
          %123 = sbr.rel (%p121) target = $region24
        $region23: #{tpu_custom_call.1} parent=19 // pred_region
          %s124 = sand.u32 %s25, 1
          %s125 = scalar_lea.sflag [#allocation3], %s124
          %s126 = sand.u32 %s25, 1
          %s127 = smul.addr %s126, 16
          %s128 = scalar_lea.vmem [#allocation2], %s127
          %s129 = smul.u32 4, %s15
          %131 = vsyncadd %s125, 0
          %s132 = smul.addr %s129, 4
          %s133 = scalar_lea.hbm %s0, %s132
          %s135 = sshll.u32 %s133, 4
          %s136 = int_to_ptr.hbm [resolvable:$true] %s135
          %s137 = sshll.u32 %s128, 4
          %s138 = int_to_ptr.vmem [resolvable:$true] %s137
          %140 = dma.hbm_to_vmem [thread:$0]  %s136, 256, %s138, %s125
        $region24: #{tpu_custom_call.1} parent=19 // pred_fallthru
          _
      $region20: #{tpu_custom_call.1} parent=5 // pred_fallthru
        _
      %p141 = scmp.le.s32.totalorder 1, %s15
      %p142 = scmp.lt.s32.totalorder %s15, 3
      %p143 = pnand %p141, %p142
      %p144 = pneg %p143
      // Predicated region
      $region25: #{tpu_custom_call.1} parent=5 // pred_check
        _
      $region26: #{tpu_custom_call.1} parent=5 // pred_check_branch
        %146 = sbr.rel (%p143) target = $region28
      $region27: #{tpu_custom_call.1} parent=5 // pred_region
        %s147 = ssub.s32 %s15, 1
        %s148 = sand.u32 %s28, 1
        %s149 = scalar_lea.sflag [#allocation3], %s148
        %s150 = sand.u32 %s28, 1
        %s151 = smul.addr %s150, 16
        %s152 = scalar_lea.vmem [#allocation2], %s151
        // Predicated region
        $region29: #{tpu_custom_call.1} parent=27 // pred_check
          %p153 = pneg %p41
        $region30: #{tpu_custom_call.1} parent=27 // pred_check_branch
          %155 = sbr.rel (%p153) target = $region32
        $region31: #{tpu_custom_call.1} parent=27 // pred_region
          %157 = dma.done %s149, 256
        $region32: #{tpu_custom_call.1} parent=27 // pred_fallthru
          _
        // Predicated region
        $region33: #{tpu_custom_call.1} parent=27 // pred_check
          %p158 = pneg %p62
        $region34: #{tpu_custom_call.1} parent=27 // pred_check_branch
          %160 = sbr.rel (%p158) target = $region36
        $region35: #{tpu_custom_call.1} parent=27 // pred_region
          %162 = dma.done [#allocation6], 6144
        $region36: #{tpu_custom_call.1} parent=27 // pred_fallthru
          _
        %s163 = sand.u32 %s28, 1
        %s164 = scalar_lea.sflag [#allocation3], %s163
        %s165 = sand.u32 %s28, 1
        %s166 = smul.addr %s165, 16
        %s167 = scalar_lea.vmem [#allocation2], %s166
        %p168 = pneg %p41
        %p169 = pneg %p38
        %p170 = pneg %p62
        %p171 = pneg %p59
        %p172 = pneg %p88
        %p173 = pneg %p85
        %s174 = sand.u32 %s75, 1
        %s175 = scalar_lea.sflag [#allocation4], %s174
        %s176 = sand.u32 %s75, 1
        %s177 = smul.addr %s176, 4
        %s178 = scalar_lea.vmem [#allocation7], %s177
        %s179 = smul.u32 4, %s20
        %s180 = smul.u32 4, %s20
        %v181 = vld [vmem:[%s152] sm:$0x77]
        %v182 = vld [vmem:[%s152 + $0x8] sm:$0x77]
        %v183 = vld [vmem:[#allocation5] sm:$0xff]
        %v184 = vld [vmem:[#allocation5 + $0x8] sm:$0xff]
        %v185 = vld [vmem:[#allocation5 + $0x10] sm:$0xff]
        %v186 = vld [vmem:[#allocation5 + $0x18] sm:$0xff]
        %v187 = vld [vmem:[#allocation5 + $0x20] sm:$0xff]
        %v188 = vld [vmem:[#allocation5 + $0x28] sm:$0xff]
        %v189 = vld [vmem:[#allocation5 + $0x30] sm:$0xff]
        %v190 = vld [vmem:[#allocation5 + $0x38] sm:$0xff]
        %192 = vset.pattern.permute.xlu0 64
        %193 = vperm.xlu0 %192, %v183
        %v194 = vpop.permute.xlu0 %193
        %197 = vset.pattern.permute.xlu0 64
        %198 = vperm.xlu0 %197, %v184
        %v199 = vpop.permute.xlu0 %198
        %202 = vset.pattern.permute.xlu0 64
        %203 = vperm.xlu0 %202, %v185
        %v204 = vpop.permute.xlu0 %203
        %207 = vset.pattern.permute.xlu0 64
        %208 = vperm.xlu0 %207, %v186
        %v209 = vpop.permute.xlu0 %208
        %212 = vset.pattern.permute.xlu0 64
        %213 = vperm.xlu0 %212, %v187
        %v214 = vpop.permute.xlu0 %213
        %217 = vset.pattern.permute.xlu0 64
        %218 = vperm.xlu0 %217, %v188
        %v219 = vpop.permute.xlu0 %218
        %222 = vset.pattern.permute.xlu0 64
        %223 = vperm.xlu0 %222, %v189
        %v224 = vpop.permute.xlu0 %223
        %227 = vset.pattern.permute.xlu0 64
        %228 = vperm.xlu0 %227, %v190
        %v229 = vpop.permute.xlu0 %228
        %233 = vst [vmem:[#allocation1] ss:$2 sm:$0xff] %v181
        %s234 = scalar_lea.vmem [#allocation1], 16
        %235 = vst [vmem:[%s234] ss:$2 sm:$0xff] %v182
        %v236 = vld.sshfl [vmem:[#allocation1] sm:$0xff pattern:$0x75316420]
        %v237 = vld.sshfl [vmem:[#allocation1 + $0x8] sm:$0xff pattern:$0x75316420]
        %v238 = vld.sshfl [vmem:[#allocation1 + $0x10] sm:$0xff pattern:$0x75316420]
        %v239 = vld.sshfl [vmem:[#allocation1 + $0x18] sm:$0xff pattern:$0x75316420]
        %vm240 = vcmask 23552
        %v241 = vsel %vm240, %v183, 0
        %v243 = vsel %vm240, %v184, 0
        %v245 = vsel %vm240, %v185, 0
        %v247 = vsel %vm240, %v186, 0
        %v249 = vsel %vm240, %v187, 0
        %v251 = vsel %vm240, %v188, 0
        %v253 = vsel %vm240, %v189, 0
        %v255 = vsel %vm240, %v190, 0
        %vm257 = vcmask 1042432
        %v258 = vsel %vm257, %v236, 0
        %v260 = vsel %vm257, %v237, 0
        %v262 = vsel %vm257, %v238, 0
        %v264 = vsel %vm257, %v239, 0
        %266 = vmatpush.msra.mxu0 0.0
        %267 = vmatpush.msra.mxu0 0.0
        %268 = vmatpush.msra.mxu0 0.0
        %269 = vmatpush.msra.mxu0 0.0
        %270 = vmatpush.msra.mxu0 0.0
        %271 = vmatpush.msra.mxu0 0.0
        %272 = vmatpush.msra.mxu0 0.0
        %273 = vmatpush.msra.mxu0 0.0
        %274 = vmatpush.msra.mxu0 0.0
        %275 = vmatpush.msra.mxu0 0.0
        %276 = vmatpush.msra.mxu0 0.0
        %277 = vmatpush.msra.mxu0 0.0
        %278 = vmatpush.msra.mxu0 0.0
        %279 = vmatpush.msra.mxu0 0.0
        %280 = vmatpush.msra.mxu0 0.0
        %281 = vmatpush.msra.mxu0 %v258
        %282 = vmatmul.f32.gmra.mxu0 %v241
        %v283 = vpop.f32.mrf.mxu0
        %v284 = vadd.f32 %v194, %v283
        %285 = vmatmul.f32.gmra.mxu0 %v243
        %v286 = vpop.f32.mrf.mxu0
        %v287 = vadd.f32 %v199, %v286
        %288 = vmatmul.f32.gmra.mxu0 %v245
        %v289 = vpop.f32.mrf.mxu0
        %v290 = vadd.f32 %v204, %v289
        %291 = vmatmul.f32.gmra.mxu0 %v247
        %v292 = vpop.f32.mrf.mxu0
        %v293 = vadd.f32 %v209, %v292
        %294 = vmatmul.f32.gmra.mxu0 %v249
        %v295 = vpop.f32.mrf.mxu0
        %v296 = vadd.f32 %v214, %v295
        %297 = vmatmul.f32.gmra.mxu0 %v251
        %v298 = vpop.f32.mrf.mxu0
        %v299 = vadd.f32 %v219, %v298
        %300 = vmatmul.f32.gmra.mxu0 %v253
        %v301 = vpop.f32.mrf.mxu0
        %v302 = vadd.f32 %v224, %v301
        %303 = vmatmul.f32.gmra.mxu0 %v255
        %v304 = vpop.f32.mrf.mxu0
        %v305 = vadd.f32 %v229, %v304
        %306 = vdwg.mxu0
        %307 = vmatpush.msra.mxu0 0.0
        %308 = vmatpush.msra.mxu0 0.0
        %309 = vmatpush.msra.mxu0 0.0
        %310 = vmatpush.msra.mxu0 0.0
        %311 = vmatpush.msra.mxu0 0.0
        %312 = vmatpush.msra.mxu0 0.0
        %313 = vmatpush.msra.mxu0 0.0
        %314 = vmatpush.msra.mxu0 0.0
        %315 = vmatpush.msra.mxu0 0.0
        %316 = vmatpush.msra.mxu0 0.0
        %317 = vmatpush.msra.mxu0 0.0
        %318 = vmatpush.msra.mxu0 0.0
        %319 = vmatpush.msra.mxu0 0.0
        %320 = vmatpush.msra.mxu0 0.0
        %321 = vmatpush.msra.mxu0 0.0
        %322 = vmatpush.msra.mxu0 %v260
        %323 = vmatmul.f32.gmra.mxu0 %v241
        %v324 = vpop.f32.mrf.mxu0
        %v325 = vadd.f32 %v194, %v324
        %326 = vmatmul.f32.gmra.mxu0 %v243
        %v327 = vpop.f32.mrf.mxu0
        %v328 = vadd.f32 %v199, %v327
        %329 = vmatmul.f32.gmra.mxu0 %v245
        %v330 = vpop.f32.mrf.mxu0
        %v331 = vadd.f32 %v204, %v330
        %332 = vmatmul.f32.gmra.mxu0 %v247
        %v333 = vpop.f32.mrf.mxu0
        %v334 = vadd.f32 %v209, %v333
        %335 = vmatmul.f32.gmra.mxu0 %v249
        %v336 = vpop.f32.mrf.mxu0
        %v337 = vadd.f32 %v214, %v336
        %338 = vmatmul.f32.gmra.mxu0 %v251
        %v339 = vpop.f32.mrf.mxu0
        %v340 = vadd.f32 %v219, %v339
        %341 = vmatmul.f32.gmra.mxu0 %v253
        %v342 = vpop.f32.mrf.mxu0
        %v343 = vadd.f32 %v224, %v342
        %344 = vmatmul.f32.gmra.mxu0 %v255
        %v345 = vpop.f32.mrf.mxu0
        %v346 = vadd.f32 %v229, %v345
        %347 = vdwg.mxu0
        %348 = vmatpush.msra.mxu0 0.0
        %349 = vmatpush.msra.mxu0 0.0
        %350 = vmatpush.msra.mxu0 0.0
        %351 = vmatpush.msra.mxu0 0.0
        %352 = vmatpush.msra.mxu0 0.0
        %353 = vmatpush.msra.mxu0 0.0
        %354 = vmatpush.msra.mxu0 0.0
        %355 = vmatpush.msra.mxu0 0.0
        %356 = vmatpush.msra.mxu0 0.0
        %357 = vmatpush.msra.mxu0 0.0
        %358 = vmatpush.msra.mxu0 0.0
        %359 = vmatpush.msra.mxu0 0.0
        %360 = vmatpush.msra.mxu0 0.0
        %361 = vmatpush.msra.mxu0 0.0
        %362 = vmatpush.msra.mxu0 0.0
        %363 = vmatpush.msra.mxu0 %v262
        %364 = vmatmul.f32.gmra.mxu0 %v241
        %v365 = vpop.f32.mrf.mxu0
        %v366 = vadd.f32 %v194, %v365
        %367 = vmatmul.f32.gmra.mxu0 %v243
        %v368 = vpop.f32.mrf.mxu0
        %v369 = vadd.f32 %v199, %v368
        %370 = vmatmul.f32.gmra.mxu0 %v245
        %v371 = vpop.f32.mrf.mxu0
        %v372 = vadd.f32 %v204, %v371
        %373 = vmatmul.f32.gmra.mxu0 %v247
        %v374 = vpop.f32.mrf.mxu0
        %v375 = vadd.f32 %v209, %v374
        %376 = vmatmul.f32.gmra.mxu0 %v249
        %v377 = vpop.f32.mrf.mxu0
        %v378 = vadd.f32 %v214, %v377
        %379 = vmatmul.f32.gmra.mxu0 %v251
        %v380 = vpop.f32.mrf.mxu0
        %v381 = vadd.f32 %v219, %v380
        %382 = vmatmul.f32.gmra.mxu0 %v253
        %v383 = vpop.f32.mrf.mxu0
        %v384 = vadd.f32 %v224, %v383
        %385 = vmatmul.f32.gmra.mxu0 %v255
        %v386 = vpop.f32.mrf.mxu0
        %v387 = vadd.f32 %v229, %v386
        %388 = vdwg.mxu0
        %389 = vmatpush.msra.mxu0 0.0
        %390 = vmatpush.msra.mxu0 0.0
        %391 = vmatpush.msra.mxu0 0.0
        %392 = vmatpush.msra.mxu0 0.0
        %393 = vmatpush.msra.mxu0 0.0
        %394 = vmatpush.msra.mxu0 0.0
        %395 = vmatpush.msra.mxu0 0.0
        %396 = vmatpush.msra.mxu0 0.0
        %397 = vmatpush.msra.mxu0 0.0
        %398 = vmatpush.msra.mxu0 0.0
        %399 = vmatpush.msra.mxu0 0.0
        %400 = vmatpush.msra.mxu0 0.0
        %401 = vmatpush.msra.mxu0 0.0
        %402 = vmatpush.msra.mxu0 0.0
        %403 = vmatpush.msra.mxu0 0.0
        %404 = vmatpush.msra.mxu0 %v264
        %405 = vmatmul.f32.gmra.mxu0 %v241
        %v406 = vpop.f32.mrf.mxu0
        %v407 = vadd.f32 %v194, %v406
        %408 = vmatmul.f32.gmra.mxu0 %v243
        %v409 = vpop.f32.mrf.mxu0
        %v410 = vadd.f32 %v199, %v409
        %411 = vmatmul.f32.gmra.mxu0 %v245
        %v412 = vpop.f32.mrf.mxu0
        %v413 = vadd.f32 %v204, %v412
        %414 = vmatmul.f32.gmra.mxu0 %v247
        %v415 = vpop.f32.mrf.mxu0
        %v416 = vadd.f32 %v209, %v415
        %417 = vmatmul.f32.gmra.mxu0 %v249
        %v418 = vpop.f32.mrf.mxu0
        %v419 = vadd.f32 %v214, %v418
        %420 = vmatmul.f32.gmra.mxu0 %v251
        %v421 = vpop.f32.mrf.mxu0
        %v422 = vadd.f32 %v219, %v421
        %423 = vmatmul.f32.gmra.mxu0 %v253
        %v424 = vpop.f32.mrf.mxu0
        %v425 = vadd.f32 %v224, %v424
        %426 = vmatmul.f32.gmra.mxu0 %v255
        %v427 = vpop.f32.mrf.mxu0
        %v428 = vadd.f32 %v229, %v427
        %429 = vdwg.mxu0
        %v430 = vmul.f32 %v284, 0.5
        %v431 = vmul.f32 %v325, 0.5
        %v432 = vmul.f32 %v366, 0.5
        %v433 = vmul.f32 %v407, 0.5
        %v434 = vmul.f32 %v287, 0.5
        %v435 = vmul.f32 %v328, 0.5
        %v436 = vmul.f32 %v369, 0.5
        %v437 = vmul.f32 %v410, 0.5
        %v438 = vmul.f32 %v290, 0.5
        %v439 = vmul.f32 %v331, 0.5
        %v440 = vmul.f32 %v372, 0.5
        %v441 = vmul.f32 %v413, 0.5
        %v442 = vmul.f32 %v293, 0.5
        %v443 = vmul.f32 %v334, 0.5
        %v444 = vmul.f32 %v375, 0.5
        %v445 = vmul.f32 %v416, 0.5
        %v446 = vmul.f32 %v296, 0.5
        %v447 = vmul.f32 %v337, 0.5
        %v448 = vmul.f32 %v378, 0.5
        %v449 = vmul.f32 %v419, 0.5
        %v450 = vmul.f32 %v299, 0.5
        %v451 = vmul.f32 %v340, 0.5
        %v452 = vmul.f32 %v381, 0.5
        %v453 = vmul.f32 %v422, 0.5
        %v454 = vmul.f32 %v302, 0.5
        %v455 = vmul.f32 %v343, 0.5
        %v456 = vmul.f32 %v384, 0.5
        %v457 = vmul.f32 %v425, 0.5
        %v458 = vmul.f32 %v305, 0.5
        %v459 = vmul.f32 %v346, 0.5
        %v460 = vmul.f32 %v387, 0.5
        %v461 = vmul.f32 %v428, 0.5
        %v462 = vtanh.pop %v430
        %v463 = vtanh.pop %v431
        %v464 = vtanh.pop %v432
        %v465 = vtanh.pop %v433
        %v466 = vtanh.pop %v434
        %v467 = vtanh.pop %v435
        %v468 = vtanh.pop %v436
        %v469 = vtanh.pop %v437
        %v470 = vtanh.pop %v438
        %v471 = vtanh.pop %v439
        %v472 = vtanh.pop %v440
        %v473 = vtanh.pop %v441
        %v474 = vtanh.pop %v442
        %v475 = vtanh.pop %v443
        %v476 = vtanh.pop %v444
        %v477 = vtanh.pop %v445
        %v478 = vtanh.pop %v446
        %v479 = vtanh.pop %v447
        %v480 = vtanh.pop %v448
        %v481 = vtanh.pop %v449
        %v482 = vtanh.pop %v450
        %v483 = vtanh.pop %v451
        %v484 = vtanh.pop %v452
        %v485 = vtanh.pop %v453
        %v486 = vtanh.pop %v454
        %v487 = vtanh.pop %v455
        %v488 = vtanh.pop %v456
        %v489 = vtanh.pop %v457
        %v490 = vtanh.pop %v458
        %v491 = vtanh.pop %v459
        %v492 = vtanh.pop %v460
        %v493 = vtanh.pop %v461
        %v494 = vmul.f32 %v462, 0.5
        %v495 = vmul.f32 %v463, 0.5
        %v496 = vmul.f32 %v464, 0.5
        %v497 = vmul.f32 %v465, 0.5
        %v498 = vmul.f32 %v466, 0.5
        %v499 = vmul.f32 %v467, 0.5
        %v500 = vmul.f32 %v468, 0.5
        %v501 = vmul.f32 %v469, 0.5
        %v502 = vmul.f32 %v470, 0.5
        %v503 = vmul.f32 %v471, 0.5
        %v504 = vmul.f32 %v472, 0.5
        %v505 = vmul.f32 %v473, 0.5
        %v506 = vmul.f32 %v474, 0.5
        %v507 = vmul.f32 %v475, 0.5
        %v508 = vmul.f32 %v476, 0.5
        %v509 = vmul.f32 %v477, 0.5
        %v510 = vmul.f32 %v478, 0.5
        %v511 = vmul.f32 %v479, 0.5
        %v512 = vmul.f32 %v480, 0.5
        %v513 = vmul.f32 %v481, 0.5
        %v514 = vmul.f32 %v482, 0.5
        %v515 = vmul.f32 %v483, 0.5
        %v516 = vmul.f32 %v484, 0.5
        %v517 = vmul.f32 %v485, 0.5
        %v518 = vmul.f32 %v486, 0.5
        %v519 = vmul.f32 %v487, 0.5
        %v520 = vmul.f32 %v488, 0.5
        %v521 = vmul.f32 %v489, 0.5
        %v522 = vmul.f32 %v490, 0.5
        %v523 = vmul.f32 %v491, 0.5
        %v524 = vmul.f32 %v492, 0.5
        %v525 = vmul.f32 %v493, 0.5
        %v526 = vadd.f32 %v494, 0.5
        %v527 = vadd.f32 %v495, 0.5
        %v528 = vadd.f32 %v496, 0.5
        %v529 = vadd.f32 %v497, 0.5
        %v530 = vadd.f32 %v498, 0.5
        %v531 = vadd.f32 %v499, 0.5
        %v532 = vadd.f32 %v500, 0.5
        %v533 = vadd.f32 %v501, 0.5
        %v534 = vadd.f32 %v502, 0.5
        %v535 = vadd.f32 %v503, 0.5
        %v536 = vadd.f32 %v504, 0.5
        %v537 = vadd.f32 %v505, 0.5
        %v538 = vadd.f32 %v506, 0.5
        %v539 = vadd.f32 %v507, 0.5
        %v540 = vadd.f32 %v508, 0.5
        %v541 = vadd.f32 %v509, 0.5
        %v542 = vadd.f32 %v510, 0.5
        %v543 = vadd.f32 %v511, 0.5
        %v544 = vadd.f32 %v512, 0.5
        %v545 = vadd.f32 %v513, 0.5
        %v546 = vadd.f32 %v514, 0.5
        %v547 = vadd.f32 %v515, 0.5
        %v548 = vadd.f32 %v516, 0.5
        %v549 = vadd.f32 %v517, 0.5
        %v550 = vadd.f32 %v518, 0.5
        %v551 = vadd.f32 %v519, 0.5
        %v552 = vadd.f32 %v520, 0.5
        %v553 = vadd.f32 %v521, 0.5
        %v554 = vadd.f32 %v522, 0.5
        %v555 = vadd.f32 %v523, 0.5
        %v556 = vadd.f32 %v524, 0.5
        %v557 = vadd.f32 %v525, 0.5
        %s558 = scalar_lea.vmem [#allocation5], 64
        %v559 = vld [vmem:[%s558] sm:$0xff]
        %v560 = vld [vmem:[%s558 + $0x8] sm:$0xff]
        %v561 = vld [vmem:[%s558 + $0x10] sm:$0xff]
        %v562 = vld [vmem:[%s558 + $0x18] sm:$0xff]
        %564 = vset.pattern.permute.xlu0 64
        %565 = vperm.xlu0 %564, %v559
        %v566 = vpop.permute.xlu0 %565
        %569 = vset.pattern.permute.xlu0 64
        %570 = vperm.xlu0 %569, %v560
        %v571 = vpop.permute.xlu0 %570
        %574 = vset.pattern.permute.xlu0 64
        %575 = vperm.xlu0 %574, %v561
        %v576 = vpop.permute.xlu0 %575
        %579 = vset.pattern.permute.xlu0 64
        %580 = vperm.xlu0 %579, %v562
        %v581 = vpop.permute.xlu0 %580
        %vm583 = vcmask 523264
        %v584 = vsel %vm583, %v559, 0
        %v586 = vsel %vm583, %v560, 0
        %v588 = vsel %vm583, %v561, 0
        %v590 = vsel %vm583, %v562, 0
        %592 = vmatpush.msra.mxu0 0.0
        %593 = vmatpush.msra.mxu0 0.0
        %594 = vmatpush.msra.mxu0 0.0
        %595 = vmatpush.msra.mxu0 0.0
        %596 = vmatpush.msra.mxu0 0.0
        %597 = vmatpush.msra.mxu0 0.0
        %598 = vmatpush.msra.mxu0 0.0
        %599 = vmatpush.msra.mxu0 0.0
        %600 = vmatpush.msra.mxu0 %v554
        %601 = vmatpush.msra.mxu0 %v550
        %602 = vmatpush.msra.mxu0 %v546
        %603 = vmatpush.msra.mxu0 %v542
        %604 = vmatpush.msra.mxu0 %v538
        %605 = vmatpush.msra.mxu0 %v534
        %606 = vmatpush.msra.mxu0 %v530
        %607 = vmatpush.msra.mxu0 %v526
        %608 = vmatmul.f32.gmra.mxu0 %v584
        %v609 = vpop.f32.mrf.mxu0
        %v610 = vadd.f32 %v566, %v609
        %611 = vmatmul.f32.gmra.mxu0 %v586
        %v612 = vpop.f32.mrf.mxu0
        %v613 = vadd.f32 %v571, %v612
        %614 = vmatmul.f32.gmra.mxu0 %v588
        %v615 = vpop.f32.mrf.mxu0
        %v616 = vadd.f32 %v576, %v615
        %617 = vmatmul.f32.gmra.mxu0 %v590
        %v618 = vpop.f32.mrf.mxu0
        %v619 = vadd.f32 %v581, %v618
        %620 = vdwg.mxu0
        %621 = vmatpush.msra.mxu0 0.0
        %622 = vmatpush.msra.mxu0 0.0
        %623 = vmatpush.msra.mxu0 0.0
        %624 = vmatpush.msra.mxu0 0.0
        %625 = vmatpush.msra.mxu0 0.0
        %626 = vmatpush.msra.mxu0 0.0
        %627 = vmatpush.msra.mxu0 0.0
        %628 = vmatpush.msra.mxu0 0.0
        %629 = vmatpush.msra.mxu0 %v555
        %630 = vmatpush.msra.mxu0 %v551
        %631 = vmatpush.msra.mxu0 %v547
        %632 = vmatpush.msra.mxu0 %v543
        %633 = vmatpush.msra.mxu0 %v539
        %634 = vmatpush.msra.mxu0 %v535
        %635 = vmatpush.msra.mxu0 %v531
        %636 = vmatpush.msra.mxu0 %v527
        %637 = vmatmul.f32.gmra.mxu0 %v584
        %v638 = vpop.f32.mrf.mxu0
        %v639 = vadd.f32 %v566, %v638
        %640 = vmatmul.f32.gmra.mxu0 %v586
        %v641 = vpop.f32.mrf.mxu0
        %v642 = vadd.f32 %v571, %v641
        %643 = vmatmul.f32.gmra.mxu0 %v588
        %v644 = vpop.f32.mrf.mxu0
        %v645 = vadd.f32 %v576, %v644
        %646 = vmatmul.f32.gmra.mxu0 %v590
        %v647 = vpop.f32.mrf.mxu0
        %v648 = vadd.f32 %v581, %v647
        %649 = vdwg.mxu0
        %650 = vmatpush.msra.mxu0 0.0
        %651 = vmatpush.msra.mxu0 0.0
        %652 = vmatpush.msra.mxu0 0.0
        %653 = vmatpush.msra.mxu0 0.0
        %654 = vmatpush.msra.mxu0 0.0
        %655 = vmatpush.msra.mxu0 0.0
        %656 = vmatpush.msra.mxu0 0.0
        %657 = vmatpush.msra.mxu0 0.0
        %658 = vmatpush.msra.mxu0 %v556
        %659 = vmatpush.msra.mxu0 %v552
        %660 = vmatpush.msra.mxu0 %v548
        %661 = vmatpush.msra.mxu0 %v544
        %662 = vmatpush.msra.mxu0 %v540
        %663 = vmatpush.msra.mxu0 %v536
        %664 = vmatpush.msra.mxu0 %v532
        %665 = vmatpush.msra.mxu0 %v528
        %666 = vmatmul.f32.gmra.mxu0 %v584
        %v667 = vpop.f32.mrf.mxu0
        %v668 = vadd.f32 %v566, %v667
        %669 = vmatmul.f32.gmra.mxu0 %v586
        %v670 = vpop.f32.mrf.mxu0
        %v671 = vadd.f32 %v571, %v670
        %672 = vmatmul.f32.gmra.mxu0 %v588
        %v673 = vpop.f32.mrf.mxu0
        %v674 = vadd.f32 %v576, %v673
        %675 = vmatmul.f32.gmra.mxu0 %v590
        %v676 = vpop.f32.mrf.mxu0
        %v677 = vadd.f32 %v581, %v676
        %678 = vdwg.mxu0
        %679 = vmatpush.msra.mxu0 0.0
        %680 = vmatpush.msra.mxu0 0.0
        %681 = vmatpush.msra.mxu0 0.0
        %682 = vmatpush.msra.mxu0 0.0
        %683 = vmatpush.msra.mxu0 0.0
        %684 = vmatpush.msra.mxu0 0.0
        %685 = vmatpush.msra.mxu0 0.0
        %686 = vmatpush.msra.mxu0 0.0
        %687 = vmatpush.msra.mxu0 %v557
        %688 = vmatpush.msra.mxu0 %v553
        %689 = vmatpush.msra.mxu0 %v549
        %690 = vmatpush.msra.mxu0 %v545
        %691 = vmatpush.msra.mxu0 %v541
        %692 = vmatpush.msra.mxu0 %v537
        %693 = vmatpush.msra.mxu0 %v533
        %694 = vmatpush.msra.mxu0 %v529
        %695 = vmatmul.f32.gmra.mxu0 %v584
        %v696 = vpop.f32.mrf.mxu0
        %v697 = vadd.f32 %v566, %v696
        %698 = vmatmul.f32.gmra.mxu0 %v586
        %v699 = vpop.f32.mrf.mxu0
        %v700 = vadd.f32 %v571, %v699
        %701 = vmatmul.f32.gmra.mxu0 %v588
        %v702 = vpop.f32.mrf.mxu0
        %v703 = vadd.f32 %v576, %v702
        %704 = vmatmul.f32.gmra.mxu0 %v590
        %v705 = vpop.f32.mrf.mxu0
        %v706 = vadd.f32 %v581, %v705
        %707 = vdwg.mxu0
        %v708 = vmul.f32 %v610, 0.5
        %v709 = vmul.f32 %v639, 0.5
        %v710 = vmul.f32 %v668, 0.5
        %v711 = vmul.f32 %v697, 0.5
        %v712 = vmul.f32 %v613, 0.5
        %v713 = vmul.f32 %v642, 0.5
        %v714 = vmul.f32 %v671, 0.5
        %v715 = vmul.f32 %v700, 0.5
        %v716 = vmul.f32 %v616, 0.5
        %v717 = vmul.f32 %v645, 0.5
        %v718 = vmul.f32 %v674, 0.5
        %v719 = vmul.f32 %v703, 0.5
        %v720 = vmul.f32 %v619, 0.5
        %v721 = vmul.f32 %v648, 0.5
        %v722 = vmul.f32 %v677, 0.5
        %v723 = vmul.f32 %v706, 0.5
        %v724 = vtanh.pop %v708
        %v725 = vtanh.pop %v709
        %v726 = vtanh.pop %v710
        %v727 = vtanh.pop %v711
        %v728 = vtanh.pop %v712
        %v729 = vtanh.pop %v713
        %v730 = vtanh.pop %v714
        %v731 = vtanh.pop %v715
        %v732 = vtanh.pop %v716
        %v733 = vtanh.pop %v717
        %v734 = vtanh.pop %v718
        %v735 = vtanh.pop %v719
        %v736 = vtanh.pop %v720
        %v737 = vtanh.pop %v721
        %v738 = vtanh.pop %v722
        %v739 = vtanh.pop %v723
        %v740 = vmul.f32 %v724, 0.5
        %v741 = vmul.f32 %v725, 0.5
        %v742 = vmul.f32 %v726, 0.5
        %v743 = vmul.f32 %v727, 0.5
        %v744 = vmul.f32 %v728, 0.5
        %v745 = vmul.f32 %v729, 0.5
        %v746 = vmul.f32 %v730, 0.5
        %v747 = vmul.f32 %v731, 0.5
        %v748 = vmul.f32 %v732, 0.5
        %v749 = vmul.f32 %v733, 0.5
        %v750 = vmul.f32 %v734, 0.5
        %v751 = vmul.f32 %v735, 0.5
        %v752 = vmul.f32 %v736, 0.5
        %v753 = vmul.f32 %v737, 0.5
        %v754 = vmul.f32 %v738, 0.5
        %v755 = vmul.f32 %v739, 0.5
        %v756 = vadd.f32 %v740, 0.5
        %v757 = vadd.f32 %v741, 0.5
        %v758 = vadd.f32 %v742, 0.5
        %v759 = vadd.f32 %v743, 0.5
        %v760 = vadd.f32 %v744, 0.5
        %v761 = vadd.f32 %v745, 0.5
        %v762 = vadd.f32 %v746, 0.5
        %v763 = vadd.f32 %v747, 0.5
        %v764 = vadd.f32 %v748, 0.5
        %v765 = vadd.f32 %v749, 0.5
        %v766 = vadd.f32 %v750, 0.5
        %v767 = vadd.f32 %v751, 0.5
        %v768 = vadd.f32 %v752, 0.5
        %v769 = vadd.f32 %v753, 0.5
        %v770 = vadd.f32 %v754, 0.5
        %v771 = vadd.f32 %v755, 0.5
        %s772 = scalar_lea.vmem [#allocation5], 128
        %v773 = vld [vmem:[%s772] sm:$0xff]
        %v774 = vld [vmem:[%s772 + $0x8] sm:$0xff]
        %776 = vset.pattern.permute.xlu0 64
        %777 = vperm.xlu0 %776, %v773
        %v778 = vpop.permute.xlu0 %777
        %781 = vset.pattern.permute.xlu0 64
        %782 = vperm.xlu0 %781, %v774
        %v783 = vpop.permute.xlu0 %782
        %vm785 = vcmask 261120
        %v786 = vsel %vm785, %v773, 0
        %v788 = vsel %vm785, %v774, 0
        %790 = vmatpush.msra.mxu0 0.0
        %791 = vmatpush.msra.mxu0 0.0
        %792 = vmatpush.msra.mxu0 0.0
        %793 = vmatpush.msra.mxu0 0.0
        %794 = vmatpush.msra.mxu0 0.0
        %795 = vmatpush.msra.mxu0 0.0
        %796 = vmatpush.msra.mxu0 0.0
        %797 = vmatpush.msra.mxu0 0.0
        %798 = vmatpush.msra.mxu0 0.0
        %799 = vmatpush.msra.mxu0 0.0
        %800 = vmatpush.msra.mxu0 0.0
        %801 = vmatpush.msra.mxu0 0.0
        %802 = vmatpush.msra.mxu0 %v768
        %803 = vmatpush.msra.mxu0 %v764
        %804 = vmatpush.msra.mxu0 %v760
        %805 = vmatpush.msra.mxu0 %v756
        %806 = vmatmul.f32.gmra.mxu0 %v786
        %v807 = vpop.f32.mrf.mxu0
        %v808 = vadd.f32 %v778, %v807
        %809 = vmatmul.f32.gmra.mxu0 %v788
        %v810 = vpop.f32.mrf.mxu0
        %v811 = vadd.f32 %v783, %v810
        %812 = vdwg.mxu0
        %813 = vmatpush.msra.mxu0 0.0
        %814 = vmatpush.msra.mxu0 0.0
        %815 = vmatpush.msra.mxu0 0.0
        %816 = vmatpush.msra.mxu0 0.0
        %817 = vmatpush.msra.mxu0 0.0
        %818 = vmatpush.msra.mxu0 0.0
        %819 = vmatpush.msra.mxu0 0.0
        %820 = vmatpush.msra.mxu0 0.0
        %821 = vmatpush.msra.mxu0 0.0
        %822 = vmatpush.msra.mxu0 0.0
        %823 = vmatpush.msra.mxu0 0.0
        %824 = vmatpush.msra.mxu0 0.0
        %825 = vmatpush.msra.mxu0 %v769
        %826 = vmatpush.msra.mxu0 %v765
        %827 = vmatpush.msra.mxu0 %v761
        %828 = vmatpush.msra.mxu0 %v757
        %829 = vmatmul.f32.gmra.mxu0 %v786
        %v830 = vpop.f32.mrf.mxu0
        %v831 = vadd.f32 %v778, %v830
        %832 = vmatmul.f32.gmra.mxu0 %v788
        %v833 = vpop.f32.mrf.mxu0
        %v834 = vadd.f32 %v783, %v833
        %835 = vdwg.mxu0
        %836 = vmatpush.msra.mxu0 0.0
        %837 = vmatpush.msra.mxu0 0.0
        %838 = vmatpush.msra.mxu0 0.0
        %839 = vmatpush.msra.mxu0 0.0
        %840 = vmatpush.msra.mxu0 0.0
        %841 = vmatpush.msra.mxu0 0.0
        %842 = vmatpush.msra.mxu0 0.0
        %843 = vmatpush.msra.mxu0 0.0
        %844 = vmatpush.msra.mxu0 0.0
        %845 = vmatpush.msra.mxu0 0.0
        %846 = vmatpush.msra.mxu0 0.0
        %847 = vmatpush.msra.mxu0 0.0
        %848 = vmatpush.msra.mxu0 %v770
        %849 = vmatpush.msra.mxu0 %v766
        %850 = vmatpush.msra.mxu0 %v762
        %851 = vmatpush.msra.mxu0 %v758
        %852 = vmatmul.f32.gmra.mxu0 %v786
        %v853 = vpop.f32.mrf.mxu0
        %v854 = vadd.f32 %v778, %v853
        %855 = vmatmul.f32.gmra.mxu0 %v788
        %v856 = vpop.f32.mrf.mxu0
        %v857 = vadd.f32 %v783, %v856
        %858 = vdwg.mxu0
        %859 = vmatpush.msra.mxu0 0.0
        %860 = vmatpush.msra.mxu0 0.0
        %861 = vmatpush.msra.mxu0 0.0
        %862 = vmatpush.msra.mxu0 0.0
        %863 = vmatpush.msra.mxu0 0.0
        %864 = vmatpush.msra.mxu0 0.0
        %865 = vmatpush.msra.mxu0 0.0
        %866 = vmatpush.msra.mxu0 0.0
        %867 = vmatpush.msra.mxu0 0.0
        %868 = vmatpush.msra.mxu0 0.0
        %869 = vmatpush.msra.mxu0 0.0
        %870 = vmatpush.msra.mxu0 0.0
        %871 = vmatpush.msra.mxu0 %v771
        %872 = vmatpush.msra.mxu0 %v767
        %873 = vmatpush.msra.mxu0 %v763
        %874 = vmatpush.msra.mxu0 %v759
        %875 = vmatmul.f32.gmra.mxu0 %v786
        %v876 = vpop.f32.mrf.mxu0
        %v877 = vadd.f32 %v778, %v876
        %878 = vmatmul.f32.gmra.mxu0 %v788
        %v879 = vpop.f32.mrf.mxu0
        %v880 = vadd.f32 %v783, %v879
        %881 = vdwg.mxu0
        %v882 = vmul.f32 %v808, 0.5
        %v883 = vmul.f32 %v831, 0.5
        %v884 = vmul.f32 %v854, 0.5
        %v885 = vmul.f32 %v877, 0.5
        %v886 = vmul.f32 %v811, 0.5
        %v887 = vmul.f32 %v834, 0.5
        %v888 = vmul.f32 %v857, 0.5
        %v889 = vmul.f32 %v880, 0.5
        %v890 = vtanh.pop %v882
        %v891 = vtanh.pop %v883
        %v892 = vtanh.pop %v884
        %v893 = vtanh.pop %v885
        %v894 = vtanh.pop %v886
        %v895 = vtanh.pop %v887
        %v896 = vtanh.pop %v888
        %v897 = vtanh.pop %v889
        %v898 = vmul.f32 %v890, 0.5
        %v899 = vmul.f32 %v891, 0.5
        %v900 = vmul.f32 %v892, 0.5
        %v901 = vmul.f32 %v893, 0.5
        %v902 = vmul.f32 %v894, 0.5
        %v903 = vmul.f32 %v895, 0.5
        %v904 = vmul.f32 %v896, 0.5
        %v905 = vmul.f32 %v897, 0.5
        %v906 = vadd.f32 %v898, 0.5
        %v907 = vadd.f32 %v899, 0.5
        %v908 = vadd.f32 %v900, 0.5
        %v909 = vadd.f32 %v901, 0.5
        %v910 = vadd.f32 %v902, 0.5
        %v911 = vadd.f32 %v903, 0.5
        %v912 = vadd.f32 %v904, 0.5
        %v913 = vadd.f32 %v905, 0.5
        %s914 = scalar_lea.vmem [#allocation5], 192
        %v915 = vld [vmem:[%s914] sm:$0xff]
        %917 = vset.pattern.permute.xlu0 64
        %918 = vperm.xlu0 %917, %v915
        %v919 = vpop.permute.xlu0 %918
        %vm921 = vcmask 130048
        %v922 = vsel %vm921, %v915, 0
        %924 = vmatpush.msra.mxu0 0.0
        %925 = vmatpush.msra.mxu0 0.0
        %926 = vmatpush.msra.mxu0 0.0
        %927 = vmatpush.msra.mxu0 0.0
        %928 = vmatpush.msra.mxu0 0.0
        %929 = vmatpush.msra.mxu0 0.0
        %930 = vmatpush.msra.mxu0 0.0
        %931 = vmatpush.msra.mxu0 0.0
        %932 = vmatpush.msra.mxu0 0.0
        %933 = vmatpush.msra.mxu0 0.0
        %934 = vmatpush.msra.mxu0 0.0
        %935 = vmatpush.msra.mxu0 0.0
        %936 = vmatpush.msra.mxu0 0.0
        %937 = vmatpush.msra.mxu0 0.0
        %938 = vmatpush.msra.mxu0 %v910
        %939 = vmatpush.msra.mxu0 %v906
        %940 = vmatmul.f32.gmra.mxu0 %v922
        %v941 = vpop.f32.mrf.mxu0
        %v942 = vadd.f32 %v919, %v941
        %943 = vdwg.mxu0
        %944 = vmatpush.msra.mxu0 0.0
        %945 = vmatpush.msra.mxu0 0.0
        %946 = vmatpush.msra.mxu0 0.0
        %947 = vmatpush.msra.mxu0 0.0
        %948 = vmatpush.msra.mxu0 0.0
        %949 = vmatpush.msra.mxu0 0.0
        %950 = vmatpush.msra.mxu0 0.0
        %951 = vmatpush.msra.mxu0 0.0
        %952 = vmatpush.msra.mxu0 0.0
        %953 = vmatpush.msra.mxu0 0.0
        %954 = vmatpush.msra.mxu0 0.0
        %955 = vmatpush.msra.mxu0 0.0
        %956 = vmatpush.msra.mxu0 0.0
        %957 = vmatpush.msra.mxu0 0.0
        %958 = vmatpush.msra.mxu0 %v911
        %959 = vmatpush.msra.mxu0 %v907
        %960 = vmatmul.f32.gmra.mxu0 %v922
        %v961 = vpop.f32.mrf.mxu0
        %v962 = vadd.f32 %v919, %v961
        %963 = vdwg.mxu0
        %964 = vmatpush.msra.mxu0 0.0
        %965 = vmatpush.msra.mxu0 0.0
        %966 = vmatpush.msra.mxu0 0.0
        %967 = vmatpush.msra.mxu0 0.0
        %968 = vmatpush.msra.mxu0 0.0
        %969 = vmatpush.msra.mxu0 0.0
        %970 = vmatpush.msra.mxu0 0.0
        %971 = vmatpush.msra.mxu0 0.0
        %972 = vmatpush.msra.mxu0 0.0
        %973 = vmatpush.msra.mxu0 0.0
        %974 = vmatpush.msra.mxu0 0.0
        %975 = vmatpush.msra.mxu0 0.0
        %976 = vmatpush.msra.mxu0 0.0
        %977 = vmatpush.msra.mxu0 0.0
        %978 = vmatpush.msra.mxu0 %v912
        %979 = vmatpush.msra.mxu0 %v908
        %980 = vmatmul.f32.gmra.mxu0 %v922
        %v981 = vpop.f32.mrf.mxu0
        %v982 = vadd.f32 %v919, %v981
        %983 = vdwg.mxu0
        %984 = vmatpush.msra.mxu0 0.0
        %985 = vmatpush.msra.mxu0 0.0
        %986 = vmatpush.msra.mxu0 0.0
        %987 = vmatpush.msra.mxu0 0.0
        %988 = vmatpush.msra.mxu0 0.0
        %989 = vmatpush.msra.mxu0 0.0
        %990 = vmatpush.msra.mxu0 0.0
        %991 = vmatpush.msra.mxu0 0.0
        %992 = vmatpush.msra.mxu0 0.0
        %993 = vmatpush.msra.mxu0 0.0
        %994 = vmatpush.msra.mxu0 0.0
        %995 = vmatpush.msra.mxu0 0.0
        %996 = vmatpush.msra.mxu0 0.0
        %997 = vmatpush.msra.mxu0 0.0
        %998 = vmatpush.msra.mxu0 %v913
        %999 = vmatpush.msra.mxu0 %v909
        %1000 = vmatmul.f32.gmra.mxu0 %v922
        %v1001 = vpop.f32.mrf.mxu0
        %v1002 = vadd.f32 %v919, %v1001
        %1003 = vdwg.mxu0
        %v1004 = vmul.f32 %v942, 0.5
        %v1005 = vmul.f32 %v962, 0.5
        %v1006 = vmul.f32 %v982, 0.5
        %v1007 = vmul.f32 %v1002, 0.5
        %v1008 = vtanh.pop %v1004
        %v1009 = vtanh.pop %v1005
        %v1010 = vtanh.pop %v1006
        %v1011 = vtanh.pop %v1007
        %v1012 = vmul.f32 %v1008, 0.5
        %v1013 = vmul.f32 %v1009, 0.5
        %v1014 = vmul.f32 %v1010, 0.5
        %v1015 = vmul.f32 %v1011, 0.5
        %v1016 = vadd.f32 %v1012, 0.5
        %v1017 = vadd.f32 %v1013, 0.5
        %v1018 = vadd.f32 %v1014, 0.5
        %v1019 = vadd.f32 %v1015, 0.5
        %s1020 = scalar_lea.vmem [#allocation5], 256
        %v1021 = vld [vmem:[%s1020] sm:$0xf]
        %1023 = vset.pattern.permute.xlu0 64
        %1024 = vperm.xlu0 %1023, %v1021
        %v1025 = vpop.permute.xlu0 %1024
        %vm1027 = vcmask 64512
        %v1028 = vsel %vm1027, %v1021, 0
        %1030 = vmatpush.msra.mxu0 0.0
        %1031 = vmatpush.msra.mxu0 0.0
        %1032 = vmatpush.msra.mxu0 0.0
        %1033 = vmatpush.msra.mxu0 0.0
        %1034 = vmatpush.msra.mxu0 0.0
        %1035 = vmatpush.msra.mxu0 0.0
        %1036 = vmatpush.msra.mxu0 0.0
        %1037 = vmatpush.msra.mxu0 0.0
        %1038 = vmatpush.msra.mxu0 0.0
        %1039 = vmatpush.msra.mxu0 0.0
        %1040 = vmatpush.msra.mxu0 0.0
        %1041 = vmatpush.msra.mxu0 0.0
        %1042 = vmatpush.msra.mxu0 0.0
        %1043 = vmatpush.msra.mxu0 0.0
        %1044 = vmatpush.msra.mxu0 0.0
        %1045 = vmatpush.msra.mxu0 %v1016
        %1046 = vmatmul.f32.gmra.mxu0 %v1028
        %v1047 = vpop.f32.mrf.mxu0
        %v1048 = vadd.f32 %v1025, %v1047
        %1049 = vdwg.mxu0
        %1050 = vmatpush.msra.mxu0 0.0
        %1051 = vmatpush.msra.mxu0 0.0
        %1052 = vmatpush.msra.mxu0 0.0
        %1053 = vmatpush.msra.mxu0 0.0
        %1054 = vmatpush.msra.mxu0 0.0
        %1055 = vmatpush.msra.mxu0 0.0
        %1056 = vmatpush.msra.mxu0 0.0
        %1057 = vmatpush.msra.mxu0 0.0
        %1058 = vmatpush.msra.mxu0 0.0
        %1059 = vmatpush.msra.mxu0 0.0
        %1060 = vmatpush.msra.mxu0 0.0
        %1061 = vmatpush.msra.mxu0 0.0
        %1062 = vmatpush.msra.mxu0 0.0
        %1063 = vmatpush.msra.mxu0 0.0
        %1064 = vmatpush.msra.mxu0 0.0
        %1065 = vmatpush.msra.mxu0 %v1017
        %1066 = vmatmul.f32.gmra.mxu0 %v1028
        %v1067 = vpop.f32.mrf.mxu0
        %v1068 = vadd.f32 %v1025, %v1067
        %1069 = vdwg.mxu0
        %1070 = vmatpush.msra.mxu0 0.0
        %1071 = vmatpush.msra.mxu0 0.0
        %1072 = vmatpush.msra.mxu0 0.0
        %1073 = vmatpush.msra.mxu0 0.0
        %1074 = vmatpush.msra.mxu0 0.0
        %1075 = vmatpush.msra.mxu0 0.0
        %1076 = vmatpush.msra.mxu0 0.0
        %1077 = vmatpush.msra.mxu0 0.0
        %1078 = vmatpush.msra.mxu0 0.0
        %1079 = vmatpush.msra.mxu0 0.0
        %1080 = vmatpush.msra.mxu0 0.0
        %1081 = vmatpush.msra.mxu0 0.0
        %1082 = vmatpush.msra.mxu0 0.0
        %1083 = vmatpush.msra.mxu0 0.0
        %1084 = vmatpush.msra.mxu0 0.0
        %1085 = vmatpush.msra.mxu0 %v1018
        %1086 = vmatmul.f32.gmra.mxu0 %v1028
        %v1087 = vpop.f32.mrf.mxu0
        %v1088 = vadd.f32 %v1025, %v1087
        %1089 = vdwg.mxu0
        %1090 = vmatpush.msra.mxu0 0.0
        %1091 = vmatpush.msra.mxu0 0.0
        %1092 = vmatpush.msra.mxu0 0.0
        %1093 = vmatpush.msra.mxu0 0.0
        %1094 = vmatpush.msra.mxu0 0.0
        %1095 = vmatpush.msra.mxu0 0.0
        %1096 = vmatpush.msra.mxu0 0.0
        %1097 = vmatpush.msra.mxu0 0.0
        %1098 = vmatpush.msra.mxu0 0.0
        %1099 = vmatpush.msra.mxu0 0.0
        %1100 = vmatpush.msra.mxu0 0.0
        %1101 = vmatpush.msra.mxu0 0.0
        %1102 = vmatpush.msra.mxu0 0.0
        %1103 = vmatpush.msra.mxu0 0.0
        %1104 = vmatpush.msra.mxu0 0.0
        %1105 = vmatpush.msra.mxu0 %v1019
        %1106 = vmatmul.f32.gmra.mxu0 %v1028
        %v1107 = vpop.f32.mrf.mxu0
        %v1108 = vadd.f32 %v1025, %v1107
        %1109 = vdwg.mxu0
        %v1110 = vmul.f32 %v1048, 0.5
        %v1111 = vmul.f32 %v1068, 0.5
        %v1112 = vmul.f32 %v1088, 0.5
        %v1113 = vmul.f32 %v1108, 0.5
        %v1114 = vtanh.pop %v1110
        %v1115 = vtanh.pop %v1111
        %v1116 = vtanh.pop %v1112
        %v1117 = vtanh.pop %v1113
        %v1118 = vmul.f32 %v1114, 0.5
        %v1119 = vmul.f32 %v1115, 0.5
        %v1120 = vmul.f32 %v1116, 0.5
        %v1121 = vmul.f32 %v1117, 0.5
        %v1122 = vadd.f32 %v1118, 0.5
        %v1123 = vadd.f32 %v1119, 0.5
        %v1124 = vadd.f32 %v1120, 0.5
        %v1125 = vadd.f32 %v1121, 0.5
        %s1126 = scalar_lea.vmem [#allocation5], 320
        %v1127 = vld [vmem:[%s1126] sm:$0x1]
        %1129 = vset.pattern.permute.xlu0 64
        %1130 = vperm.xlu0 %1129, %v1127
        %v1131 = vpop.permute.xlu0 %1130
        %vm1133 = vcmask 31744
        %v1134 = vsel %vm1133, %v1127, 0
        %vm1136 = vcmask 1043456
        %v1138 = vsel %vm1136, %v1122, 0
        %v1141 = vsel %vm1136, %v1123, 0
        %v1144 = vsel %vm1136, %v1124, 0
        %v1147 = vsel %vm1136, %v1125, 0
        %1149 = vmatpush.msra.mxu0 0.0
        %1150 = vmatpush.msra.mxu0 0.0
        %1151 = vmatpush.msra.mxu0 0.0
        %1152 = vmatpush.msra.mxu0 0.0
        %1153 = vmatpush.msra.mxu0 0.0
        %1154 = vmatpush.msra.mxu0 0.0
        %1155 = vmatpush.msra.mxu0 0.0
        %1156 = vmatpush.msra.mxu0 0.0
        %1157 = vmatpush.msra.mxu0 0.0
        %1158 = vmatpush.msra.mxu0 0.0
        %1159 = vmatpush.msra.mxu0 0.0
        %1160 = vmatpush.msra.mxu0 0.0
        %1161 = vmatpush.msra.mxu0 0.0
        %1162 = vmatpush.msra.mxu0 0.0
        %1163 = vmatpush.msra.mxu0 0.0
        %1164 = vmatpush.msra.mxu0 %v1138
        %1165 = vmatmul.f32.gmra.mxu0 %v1134
        %v1166 = vpop.f32.mrf.mxu0
        %v1167 = vadd.f32 %v1131, %v1166
        %1168 = vdwg.mxu0
        %1169 = vmatpush.msra.mxu0 0.0
        %1170 = vmatpush.msra.mxu0 0.0
        %1171 = vmatpush.msra.mxu0 0.0
        %1172 = vmatpush.msra.mxu0 0.0
        %1173 = vmatpush.msra.mxu0 0.0
        %1174 = vmatpush.msra.mxu0 0.0
        %1175 = vmatpush.msra.mxu0 0.0
        %1176 = vmatpush.msra.mxu0 0.0
        %1177 = vmatpush.msra.mxu0 0.0
        %1178 = vmatpush.msra.mxu0 0.0
        %1179 = vmatpush.msra.mxu0 0.0
        %1180 = vmatpush.msra.mxu0 0.0
        %1181 = vmatpush.msra.mxu0 0.0
        %1182 = vmatpush.msra.mxu0 0.0
        %1183 = vmatpush.msra.mxu0 0.0
        %1184 = vmatpush.msra.mxu0 %v1141
        %1185 = vmatmul.f32.gmra.mxu0 %v1134
        %v1186 = vpop.f32.mrf.mxu0
        %v1187 = vadd.f32 %v1131, %v1186
        %1188 = vdwg.mxu0
        %1189 = vmatpush.msra.mxu0 0.0
        %1190 = vmatpush.msra.mxu0 0.0
        %1191 = vmatpush.msra.mxu0 0.0
        %1192 = vmatpush.msra.mxu0 0.0
        %1193 = vmatpush.msra.mxu0 0.0
        %1194 = vmatpush.msra.mxu0 0.0
        %1195 = vmatpush.msra.mxu0 0.0
        %1196 = vmatpush.msra.mxu0 0.0
        %1197 = vmatpush.msra.mxu0 0.0
        %1198 = vmatpush.msra.mxu0 0.0
        %1199 = vmatpush.msra.mxu0 0.0
        %1200 = vmatpush.msra.mxu0 0.0
        %1201 = vmatpush.msra.mxu0 0.0
        %1202 = vmatpush.msra.mxu0 0.0
        %1203 = vmatpush.msra.mxu0 0.0
        %1204 = vmatpush.msra.mxu0 %v1144
        %1205 = vmatmul.f32.gmra.mxu0 %v1134
        %v1206 = vpop.f32.mrf.mxu0
        %v1207 = vadd.f32 %v1131, %v1206
        %1208 = vdwg.mxu0
        %1209 = vmatpush.msra.mxu0 0.0
        %1210 = vmatpush.msra.mxu0 0.0
        %1211 = vmatpush.msra.mxu0 0.0
        %1212 = vmatpush.msra.mxu0 0.0
        %1213 = vmatpush.msra.mxu0 0.0
        %1214 = vmatpush.msra.mxu0 0.0
        %1215 = vmatpush.msra.mxu0 0.0
        %1216 = vmatpush.msra.mxu0 0.0
        %1217 = vmatpush.msra.mxu0 0.0
        %1218 = vmatpush.msra.mxu0 0.0
        %1219 = vmatpush.msra.mxu0 0.0
        %1220 = vmatpush.msra.mxu0 0.0
        %1221 = vmatpush.msra.mxu0 0.0
        %1222 = vmatpush.msra.mxu0 0.0
        %1223 = vmatpush.msra.mxu0 0.0
        %1224 = vmatpush.msra.mxu0 %v1147
        %1225 = vmatmul.f32.gmra.mxu0 %v1134
        %v1226 = vpop.f32.mrf.mxu0
        %v1227 = vadd.f32 %v1131, %v1226
        %1228 = vdwg.mxu0
        %v1229 = vmul.f32 %v1167, 0.5
        %v1230 = vmul.f32 %v1187, 0.5
        %v1231 = vmul.f32 %v1207, 0.5
        %v1232 = vmul.f32 %v1227, 0.5
        %v1233 = vtanh.pop %v1229
        %v1234 = vtanh.pop %v1230
        %v1235 = vtanh.pop %v1231
        %v1236 = vtanh.pop %v1232
        %v1237 = vmul.f32 %v1233, 0.5
        %v1238 = vmul.f32 %v1234, 0.5
        %v1239 = vmul.f32 %v1235, 0.5
        %v1240 = vmul.f32 %v1236, 0.5
        %v1241 = vadd.f32 %v1237, 0.5
        %v1242 = vadd.f32 %v1238, 0.5
        %v1243 = vadd.f32 %v1239, 0.5
        %v1244 = vadd.f32 %v1240, 0.5
        %v1249 = vrot.slane %v1242, 7
        %v1250 = vrot.slane %v1243, 6
        %v1251 = vrot.slane %v1244, 5
        %vm1252 = vcmask 1040384
        %v1253 = vsel %vm1252, %v1241, %v1249
        %vm1254 = vcmask 1042434
        %v1255 = vsel %vm1254, %v1250, %v1251
        %vm1256 = vcmask 1041408
        %v1257 = vsel %vm1256, %v1253, %v1255
        %v1259 = vlaneseq
        %vm1260 = vcmp.ge.s32.totalorder %v1259, 0
        %vm1261 = vcmp.lt.s32.totalorder %v1259, 512
        %vm1262 = vmand %vm1260, %vm1261
        %1263 = vst.msk [vmem:[%s178] sm:$0xf] %vm1262, %v1257
        %s1264 = sand.u32 %s75, 1
        %s1265 = scalar_lea.sflag [#allocation4], %s1264
        %s1266 = sand.u32 %s75, 1
        %s1267 = smul.addr %s1266, 4
        %s1268 = scalar_lea.vmem [#allocation7], %s1267
        // Predicated region
        $region37: #{tpu_custom_call.1} parent=27 // pred_check
          %p1269 = pneg %p85
        $region38: #{tpu_custom_call.1} parent=27 // pred_check_branch
          %1271 = sbr.rel (%p1269) target = $region40
        $region39: #{tpu_custom_call.1} parent=27 // pred_region
          %s1272 = smul.u32 4, %s20
          %1274 = vsyncadd %s1265, 0
          %s1275 = scalar_lea.hbm %s2, %s1272
          %s1277 = sshll.u32 %s1268, 4
          %s1278 = int_to_ptr.vmem [resolvable:$true] %s1277
          %s1279 = sshll.u32 %s1275, 4
          %s1280 = int_to_ptr.hbm [resolvable:$true] %s1279
          %1282 = dma.vmem_to_hbm [thread:$0]  %s1278, 64, %s1280, %s1265
        $region40: #{tpu_custom_call.1} parent=27 // pred_fallthru
          _
      $region28: #{tpu_custom_call.1} parent=5 // pred_fallthru
        _
      %p1283 = scmp.le.s32.totalorder 2, %s15
      // Predicated region
      $region41: #{tpu_custom_call.1} parent=5 // pred_check
        %p1284 = pneg %p1283
      $region42: #{tpu_custom_call.1} parent=5 // pred_check_branch
        %1286 = sbr.rel (%p1284) target = $region44
      $region43: #{tpu_custom_call.1} parent=5 // pred_region
        %s1287 = ssub.s32 %s15, 2
        // Predicated region
        $region45: #{tpu_custom_call.1} parent=43 // pred_check
          %p1288 = pneg %p91
        $region46: #{tpu_custom_call.1} parent=43 // pred_check_branch
          %1290 = sbr.rel (%p1288) target = $region48
        $region47: #{tpu_custom_call.1} parent=43 // pred_region
          %s1291 = sand.u32 %s76, 1
          %s1292 = scalar_lea.sflag [#allocation4], %s1291
          %s1293 = sand.u32 %s76, 1
          %s1294 = smul.addr %s1293, 4
          %s1295 = scalar_lea.vmem [#allocation7], %s1294
          %1297 = dma.done %s1292, 64
        $region48: #{tpu_custom_call.1} parent=43 // pred_fallthru
          _
      $region44: #{tpu_custom_call.1} parent=5 // pred_fallthru
        _
    $region6: #{tpu_custom_call.1} parent=1 // loop_footer
      %s19 = sadd.s32 1, %s15
    $region7: #{tpu_custom_call.1} parent=1 // loop_footer_branch
      %14 = sbr.rel target = $region3
    $region8: #{tpu_custom_call.1} parent=1 // loop_exit
      _
    %1298 = vsyncpa [#allocation3], 1
    %s1299 = scalar_lea.sflag [#allocation3], 1
    %1300 = vsyncpa %s1299, 1
    %1301 = vsyncpa [#allocation6], 1
    %1302 = vsyncpa [#allocation4], 1
    %s1303 = scalar_lea.sflag [#allocation4], 1
    %1304 = vsyncpa %s1303, 1

</llo_original>
